<compile_context>
chip_gen: v5e
topology: v5e:2x2
jax: 0.10.0
libtpu: 0.0.40
codegen_flags: <defaults>
</compile_context>

<pallas_src>
import jax
import jax.numpy as jnp
from jax.experimental import pallas as pl
from jax.experimental.pallas import tpu as pltpu

EPS = 1e-12


def asp_kernel(x_ref, w1x_ref, w1ms_ref, b1_ref,
               bn_scale_ref, bn_shift_ref, w2_ref, b2_ref, out_ref):
    # x_ref: (Bt, C, L) bf16, out_ref: (Bt, 1, 2C) f32
    Bt, C, L = x_ref.shape
    inv_L = 1.0 / L

    # Loop-invariant weight loads (resident across batch iterations).
    w1x = w1x_ref[...]            # (A, C)  bf16 (MXU operand)
    w1ms = w1ms_ref[...]          # (A, 2C) f32  (fused [w1m | w1s], tiny)
    w2 = w2_ref[...]              # (C, A)  bf16 (MXU operand)
    b1 = b1_ref[...]              # (A, 1)  f32
    bn_scale = bn_scale_ref[...]  # (A, 1)  f32
    bn_shift = bn_shift_ref[...]  # (A, 1)  f32
    b2 = b2_ref[...]              # (C, 1)  f32

    def body(bi, carry):
        x_bf = x_ref[bi]                              # (C, L) bf16 (MXU operand)
        x = x_bf.astype(jnp.float32)                  # (C, L) f32 for statistics

        # ---- global-context stats (uniform weights 1/L), two-pass form ----
        mean_g = jnp.sum(x, axis=1, keepdims=True) * inv_L          # (C, 1)
        dg = x - mean_g
        var_g = jnp.sum(dg * dg, axis=1, keepdims=True) * inv_L
        std_g = jnp.sqrt(jnp.maximum(var_g, EPS))
        stats_g = jnp.concatenate([mean_g, std_g], axis=0)          # (2C, 1)

        # ---- TDNN 1x1 conv on cat([x, mean, std]) == split matmuls ----
        # Fold the (constant-over-time) global-context term and b1 together.
        gpb = jnp.dot(w1ms, stats_g,
                      preferred_element_type=jnp.float32) + b1      # (A, 1)
        h = jnp.dot(w1x, x_bf,
                    preferred_element_type=jnp.float32)             # (A, L)
        h = jnp.maximum(h + gpb, 0.0)                               # ReLU
        h = h * bn_scale + bn_shift                                 # eval-mode BN
        h = jnp.tanh(h)

        # ---- attention scores: 1x1 conv back to C channels ----
        scores = jnp.dot(w2, h.astype(jnp.bfloat16),
                         preferred_element_type=jnp.float32) + b2   # (C, L)

        # ---- softmax over time (mask all-ones for lengths=None) ----
        s_max = jnp.max(scores, axis=1, keepdims=True)
        e = jnp.exp(scores - s_max)                                 # (C, L)
        inv_den = 1.0 / jnp.sum(e, axis=1, keepdims=True)           # (C, 1) exact

        # ---- attention-weighted statistics (two-pass (x - mean)^2 form) ----
        mean_w = jnp.sum(e * x, axis=1, keepdims=True) * inv_den    # (C, 1)
        dw = x - mean_w
        var_w = jnp.sum(e * (dw * dw), axis=1, keepdims=True) * inv_den
        std_w = jnp.sqrt(jnp.maximum(var_w, EPS))

        # lane-dense store: [mean | std] along the lane axis, one store per batch
        row = jnp.concatenate([mean_w[:, 0][None, :],
                               std_w[:, 0][None, :]], axis=1)       # (1, 2C)
        out_ref[bi] = row.astype(out_ref.dtype)
        return carry

    jax.lax.fori_loop(0, Bt, body, 0)


def _vmem_capacity_bytes():
    """Per-core VMEM capacity; conservative (v7x) fallback if query fails."""
    try:
        info = pltpu.get_tpu_info()
        cap = getattr(info, "vmem_capacity_bytes", None)
        if cap:
            return int(cap)
    except Exception:
        pass
    return 64 * 1024 * 1024


def _pick_batch_tile(N, C, L, A, vmem_budget, cap=8):
    """Largest divisor of N such that the kernel fits the VMEM budget."""
    # Live f32 temporaries for one loop iteration (~5 (C,L) slabs + 2 (A,L))
    temps = 5 * C * L * 4 + 2 * A * L * 4
    # Double-buffered weights: bf16 w1x/w2, f32 w1ms + small f32 vectors
    weights = 2 * 2 * (A * C + C * A) + 2 * 4 * (A * 2 * C) + 2 * 4 * (3 * A + C)
    # Per-batch cost: double-buffered bf16 input block + f32 output row
    per_b = 2 * C * L * 2 + 2 * 2 * C * 4
    avail = vmem_budget - temps - weights
    bt_cap = max(1, int(avail // per_b)) if avail > per_b else 1
    bt_cap = min(bt_cap, cap)
    if N >= 2:
        # keep grid >= 2 so the "parallel" axis can shard across v7x's two TCs
        bt_cap = min(bt_cap, max(1, N // 2))
    bt = 1
    for d in range(1, min(N, bt_cap) + 1):
        if N % d == 0:
            bt = d
    return bt


def attentive_statistics_pooling(x, params, *, batch_tile=None):
    """x: [N, C, L] -> pooled stats [N, 2C, 1] (float32)."""
    N, C, L = x.shape
    A = params["w1x"].shape[0]

    # Stream x in bf16 (halves HBM traffic); statistics are f32 in-kernel.
    if x.dtype != jnp.bfloat16:
        x = x.astype(jnp.bfloat16)

    vmem_budget = (_vmem_capacity_bytes() * 3) // 4   # leave compiler headroom
    bt = _pick_batch_tile(N, C, L, A, vmem_budget,
                          cap=batch_tile if batch_tile is not None else 8)
    grid = (N // bt,)

    def full(a):
        return pl.BlockSpec(a.shape, lambda b: (0,) * a.ndim)

    out = pl.pallas_call(
        asp_kernel,
        out_shape=jax.ShapeDtypeStruct((N, 1, 2 * C), jnp.float32),
        grid_spec=pltpu.PrefetchScalarGridSpec(
            num_scalar_prefetch=0,
            grid=grid,
            in_specs=[
                pl.BlockSpec((bt, C, L), lambda b: (b, 0, 0)),   # x
                full(params["w1x"]),       # (A, C)   bf16
                full(params["w1ms"]),      # (A, 2C)  f32
                full(params["b1"]),        # (A, 1)   f32
                full(params["bn_scale"]),  # (A, 1)   f32
                full(params["bn_shift"]),  # (A, 1)   f32
                full(params["w2"]),        # (C, A)   bf16
                full(params["b2"]),        # (C, 1)   f32
            ],
            out_specs=pl.BlockSpec((bt, 1, 2 * C), lambda b: (b, 0, 0)),
        ),
        compiler_params=pltpu.CompilerParams(
            dimension_semantics=("parallel",),
            vmem_limit_bytes=int(vmem_budget),
        ),
    )(x, params["w1x"], params["w1ms"], params["b1"],
      params["bn_scale"], params["bn_shift"], params["w2"], params["b2"])

    # Match the PyTorch module's [N, 2C, 1] output convention (trivial reshape).
    return out.reshape(N, 2 * C, 1)


def make_params(key, channels, attention_channels):
    C, A = channels, attention_channels
    ks = jax.random.split(key, 8)
    # TDNN 1x1 conv: weight [A, 3C]; split into the x slice and fused mean/std slice
    w1 = jax.random.normal(ks[0], (A, 3 * C), jnp.float32) * 0.1
    b1 = jax.random.normal(ks[1], (A, 1), jnp.float32) * 0.1
    # BatchNorm1d(A) eval-mode params / running stats (deterministic init)
    gamma = 1.0 + 0.1 * jax.random.normal(ks[2], (A, 1), jnp.float32)
    beta = 0.1 * jax.random.normal(ks[3], (A, 1), jnp.float32)
    run_mean = 0.1 * jax.random.normal(ks[4], (A, 1), jnp.float32)
    run_var = 1.0 + 0.1 * jax.random.uniform(ks[5], (A, 1), jnp.float32)
    bn_eps = 1e-5
    bn_scale = gamma / jnp.sqrt(run_var + bn_eps)
    bn_shift = beta - run_mean * bn_scale
    # final 1x1 conv: weight [C, A]
    w2 = jax.random.normal(ks[6], (C, A), jnp.float32) * 0.1
    b2 = jax.random.normal(ks[7], (C, 1), jnp.float32) * 0.1
    return {
        "w1x": w1[:, :C].astype(jnp.bfloat16),
        "w1ms": w1[:, C:].astype(jnp.float32),    # [w1m | w1s] fused -> (A, 2C), f32
        "b1": b1,
        "bn_scale": bn_scale,
        "bn_shift": bn_shift,
        "w2": w2.astype(jnp.bfloat16),
        "b2": b2,
    }


def reference_asp(x_bf16, params):
    """Plain-JAX reference mirroring the kernel's numerics (bf16 x, f32 accum)."""
    x = x_bf16.astype(jnp.float32)
    w1x = params["w1x"].astype(jnp.float32)
    w1ms = params["w1ms"].astype(jnp.float32)
    w2 = params["w2"].astype(jnp.float32)
    mean_g = jnp.mean(x, axis=2, keepdims=True)
    std_g = jnp.sqrt(jnp.maximum(
        jnp.mean((x - mean_g) ** 2, axis=2, keepdims=True), EPS))
    stats_g = jnp.concatenate([mean_g, std_g], axis=1)                  # (N,2C,1)
    gctx = jnp.einsum('ac,ncl->nal', w1ms, stats_g) + params["b1"][None]
    h = jnp.einsum('ac,ncl->nal', w1x, x) + gctx
    h = jnp.maximum(h, 0.0)
    h = h * params["bn_scale"][None] + params["bn_shift"][None]
    h = jnp.tanh(h)
    h = h.astype(jnp.bfloat16).astype(jnp.float32)
    scores = jnp.einsum('ca,nal->ncl', w2, h) + params["b2"][None]
    attn = jax.nn.softmax(scores, axis=2)
    mean_w = jnp.sum(attn * x, axis=2)
    var_w = jnp.sum(attn * (x - mean_w[:, :, None]) ** 2, axis=2)
    std_w = jnp.sqrt(jnp.maximum(var_w, EPS))
    return jnp.concatenate([mean_w, std_w], axis=1)[:, :, None]


if __name__ == "__main__":
    N, C, L = 4, 16, 32         # batch, channels, time (small test shapes)
    A = 32                      # attention_channels

    key = jax.random.PRNGKey(0)
    kx, kp = jax.random.split(key)
    x = jax.random.normal(kx, (N, C, L), jnp.float32)
    params = make_params(kp, C, A)

    out = attentive_statistics_pooling(x, params)
    out = jax.block_until_ready(out)
    assert out.shape == (N, 2 * C, 1), out.shape
    assert bool(jnp.all(jnp.isfinite(out)))

    ref = reference_asp(x.astype(jnp.bfloat16), params)
    max_err = float(jnp.max(jnp.abs(out - ref)))
    assert max_err < 5e-2, f"max abs err {max_err}"
    print("KERNEL_OK")
</pallas_src>

<mosaic_0001>
module attributes {stable_mosaic.version = 11 : i64} {
  func.func @asp_kernel(%arg0: i32, %arg1: memref<2x16x32xbf16, #tpu.memory_space<vmem>>, %arg2: memref<32x16xbf16, #tpu.memory_space<vmem>>, %arg3: memref<32x32xf32, #tpu.memory_space<vmem>>, %arg4: memref<32x1xf32, #tpu.memory_space<vmem>>, %arg5: memref<32x1xf32, #tpu.memory_space<vmem>>, %arg6: memref<32x1xf32, #tpu.memory_space<vmem>>, %arg7: memref<16x32xbf16, #tpu.memory_space<vmem>>, %arg8: memref<16x1xf32, #tpu.memory_space<vmem>>, %arg9: memref<2x1x32xf32, #tpu.memory_space<vmem>>) attributes {dimension_semantics = [#tpu.dimension_semantics<parallel>], iteration_bounds = array<i64: 2>, scalar_prefetch = 0 : i64, scratch_operands = 0 : i64, tpu.core_type = #tpu.core_type<tc>, window_params = [{transform_indices = @transform_0, window_bounds = array<i64: 2, 16, 32>}, {pipeline_mode = #tpu.pipeline_mode<synchronous>, transform_indices = @transform_1, window_bounds = array<i64: 32, 16>}, {pipeline_mode = #tpu.pipeline_mode<synchronous>, transform_indices = @transform_2, window_bounds = array<i64: 32, 32>}, {pipeline_mode = #tpu.pipeline_mode<synchronous>, transform_indices = @transform_3, window_bounds = array<i64: 32, 1>}, {pipeline_mode = #tpu.pipeline_mode<synchronous>, transform_indices = @transform_4, window_bounds = array<i64: 32, 1>}, {pipeline_mode = #tpu.pipeline_mode<synchronous>, transform_indices = @transform_5, window_bounds = array<i64: 32, 1>}, {pipeline_mode = #tpu.pipeline_mode<synchronous>, transform_indices = @transform_6, window_bounds = array<i64: 16, 32>}, {pipeline_mode = #tpu.pipeline_mode<synchronous>, transform_indices = @transform_7, window_bounds = array<i64: 16, 1>}, {transform_indices = @transform_8, window_bounds = array<i64: 2, 1, 32>}]} {
    %c0 = arith.constant 0 : index
    %c0_0 = arith.constant 0 : index
    %0 = vector.load %arg2[%c0, %c0_0] : memref<32x16xbf16, #tpu.memory_space<vmem>>, vector<32x16xbf16>
    %c0_1 = arith.constant 0 : index
    %c0_2 = arith.constant 0 : index
    %1 = vector.load %arg3[%c0_1, %c0_2] : memref<32x32xf32, #tpu.memory_space<vmem>>, vector<32x32xf32>
    %c0_3 = arith.constant 0 : index
    %c0_4 = arith.constant 0 : index
    %2 = vector.load %arg7[%c0_3, %c0_4] : memref<16x32xbf16, #tpu.memory_space<vmem>>, vector<16x32xbf16>
    %c0_5 = arith.constant 0 : index
    %c0_6 = arith.constant 0 : index
    %3 = vector.load %arg4[%c0_5, %c0_6] : memref<32x1xf32, #tpu.memory_space<vmem>>, vector<32x1xf32>
    %c0_7 = arith.constant 0 : index
    %c0_8 = arith.constant 0 : index
    %4 = vector.load %arg5[%c0_7, %c0_8] : memref<32x1xf32, #tpu.memory_space<vmem>>, vector<32x1xf32>
    %c0_9 = arith.constant 0 : index
    %c0_10 = arith.constant 0 : index
    %5 = vector.load %arg6[%c0_9, %c0_10] : memref<32x1xf32, #tpu.memory_space<vmem>>, vector<32x1xf32>
    %c0_11 = arith.constant 0 : index
    %c0_12 = arith.constant 0 : index
    %6 = vector.load %arg8[%c0_11, %c0_12] : memref<16x1xf32, #tpu.memory_space<vmem>>, vector<16x1xf32>
    %c0_i32 = arith.constant 0 : i32
    %c2_i32 = arith.constant 2 : i32
    %7 = arith.addi %c0_i32, %c2_i32 : i32
    %c1_i32 = arith.constant 1 : i32
    scf.for %arg10 = %c0_i32 to %7 step %c1_i32  : i32 {
      %8 = arith.index_cast %arg10 : i32 to index
      %c0_14 = arith.constant 0 : index
      %c0_15 = arith.constant 0 : index
      %9 = vector.load %arg1[%8, %c0_14, %c0_15] : memref<2x16x32xbf16, #tpu.memory_space<vmem>>, vector<1x16x32xbf16>
      %10 = vector.shape_cast %9 : vector<1x16x32xbf16> to vector<16x32xbf16>
      %11 = arith.extf %10 : vector<16x32xbf16> to vector<16x32xf32>
      %cst = arith.constant dense<0.000000e+00> : vector<16xf32>
      %12 = vector.multi_reduction <add>, %11, %cst [1] : vector<16x32xf32> to vector<16xf32>
      %13 = vector.shape_cast %12 : vector<16xf32> to vector<16x1xf32>
      %cst_16 = arith.constant 3.125000e-02 : f32
      %14 = vector.broadcast %cst_16 : f32 to vector<16x1xf32>
      %15 = arith.mulf %13, %14 : vector<16x1xf32>
      %16 = vector.broadcast %15 : vector<16x1xf32> to vector<16x32xf32>
      %17 = arith.subf %11, %16 : vector<16x32xf32>
      %18 = arith.mulf %17, %17 : vector<16x32xf32>
      %cst_17 = arith.constant dense<0.000000e+00> : vector<16xf32>
      %19 = vector.multi_reduction <add>, %18, %cst_17 [1] : vector<16x32xf32> to vector<16xf32>
      %20 = vector.shape_cast %19 : vector<16xf32> to vector<16x1xf32>
      %cst_18 = arith.constant 3.125000e-02 : f32
      %21 = vector.broadcast %cst_18 : f32 to vector<16x1xf32>
      %22 = arith.mulf %20, %21 : vector<16x1xf32>
      %cst_19 = arith.constant 9.99999996E-13 : f32
      %23 = vector.broadcast %cst_19 : f32 to vector<16x1xf32>
      %24 = arith.maximumf %22, %23 : vector<16x1xf32>
      %25 = math.sqrt %24 : vector<16x1xf32>
      %26 = tpu.concatenate %15, %25 in 0 : vector<16x1xf32>, vector<16x1xf32> -> vector<32x1xf32>
      %cst_20 = arith.constant dense<0.000000e+00> : vector<32x1xf32>
      %27 = tpu.matmul %1, %26, %cst_20 {dimension_numbers = #tpu.dot_dimension_numbers<[1], [0], [0], [1], [0, 0, 1, 1], [], []>} : vector<32x32xf32>, vector<32x1xf32>, vector<32x1xf32> -> vector<32x1xf32>
      %28 = arith.addf %27, %3 : vector<32x1xf32>
      %cst_21 = arith.constant dense<0.000000e+00> : vector<32x32xf32>
      %29 = tpu.matmul %0, %10, %cst_21 {dimension_numbers = #tpu.dot_dimension_numbers<[1], [0], [0], [1], [0, 0, 1, 1], [], []>} : vector<32x16xbf16>, vector<16x32xbf16>, vector<32x32xf32> -> vector<32x32xf32>
      %30 = vector.broadcast %28 : vector<32x1xf32> to vector<32x32xf32>
      %31 = arith.addf %29, %30 : vector<32x32xf32>
      %cst_22 = arith.constant 0.000000e+00 : f32
      %32 = vector.broadcast %cst_22 : f32 to vector<32x32xf32>
      %33 = arith.maximumf %31, %32 : vector<32x32xf32>
      %34 = vector.broadcast %4 : vector<32x1xf32> to vector<32x32xf32>
      %35 = arith.mulf %33, %34 : vector<32x32xf32>
      %36 = vector.broadcast %5 : vector<32x1xf32> to vector<32x32xf32>
      %37 = arith.addf %35, %36 : vector<32x32xf32>
      %38 = math.tanh %37 : vector<32x32xf32>
      %39 = arith.truncf %38 : vector<32x32xf32> to vector<32x32xbf16>
      %cst_23 = arith.constant dense<0.000000e+00> : vector<16x32xf32>
      %40 = tpu.matmul %2, %39, %cst_23 {dimension_numbers = #tpu.dot_dimension_numbers<[1], [0], [0], [1], [0, 0, 1, 1], [], []>} : vector<16x32xbf16>, vector<32x32xbf16>, vector<16x32xf32> -> vector<16x32xf32>
      %41 = vector.broadcast %6 : vector<16x1xf32> to vector<16x32xf32>
      %42 = arith.addf %40, %41 : vector<16x32xf32>
      %cst_24 = arith.constant dense<0xFF800000> : vector<16xf32>
      %43 = vector.multi_reduction <maximumf>, %42, %cst_24 [1] : vector<16x32xf32> to vector<16xf32>
      %44 = vector.shape_cast %43 : vector<16xf32> to vector<16x1xf32>
      %45 = vector.broadcast %44 : vector<16x1xf32> to vector<16x32xf32>
      %46 = arith.subf %42, %45 : vector<16x32xf32>
      %47 = math.exp %46 : vector<16x32xf32>
      %cst_25 = arith.constant dense<0.000000e+00> : vector<16xf32>
      %48 = vector.multi_reduction <add>, %47, %cst_25 [1] : vector<16x32xf32> to vector<16xf32>
      %49 = vector.shape_cast %48 : vector<16xf32> to vector<16x1xf32>
      %cst_26 = arith.constant 1.000000e+00 : f32
      %50 = vector.broadcast %cst_26 : f32 to vector<16x1xf32>
      %51 = arith.divf %50, %49 : vector<16x1xf32>
      %52 = arith.mulf %47, %11 : vector<16x32xf32>
      %cst_27 = arith.constant dense<0.000000e+00> : vector<16xf32>
      %53 = vector.multi_reduction <add>, %52, %cst_27 [1] : vector<16x32xf32> to vector<16xf32>
      %54 = vector.shape_cast %53 : vector<16xf32> to vector<16x1xf32>
      %55 = arith.mulf %54, %51 : vector<16x1xf32>
      %56 = vector.broadcast %55 : vector<16x1xf32> to vector<16x32xf32>
      %57 = arith.subf %11, %56 : vector<16x32xf32>
      %58 = arith.mulf %57, %57 : vector<16x32xf32>
      %59 = arith.mulf %47, %58 : vector<16x32xf32>
      %cst_28 = arith.constant dense<0.000000e+00> : vector<16xf32>
      %60 = vector.multi_reduction <add>, %59, %cst_28 [1] : vector<16x32xf32> to vector<16xf32>
      %61 = vector.shape_cast %60 : vector<16xf32> to vector<16x1xf32>
      %62 = arith.mulf %61, %51 : vector<16x1xf32>
      %cst_29 = arith.constant 9.99999996E-13 : f32
      %63 = vector.broadcast %cst_29 : f32 to vector<16x1xf32>
      %64 = arith.maximumf %62, %63 : vector<16x1xf32>
      %65 = math.sqrt %64 : vector<16x1xf32>
      %66 = vector.shape_cast %55 : vector<16x1xf32> to vector<16xf32>
      %67 = vector.shape_cast %66 : vector<16xf32> to vector<1x16xf32>
      %68 = vector.shape_cast %65 : vector<16x1xf32> to vector<16xf32>
      %69 = vector.shape_cast %68 : vector<16xf32> to vector<1x16xf32>
      %70 = tpu.concatenate %67, %69 in 1 : vector<1x16xf32>, vector<1x16xf32> -> vector<1x32xf32>
      %71 = arith.index_cast %arg10 : i32 to index
      %c0_30 = arith.constant 0 : index
      %c0_31 = arith.constant 0 : index
      %72 = vector.load %arg9[%71, %c0_30, %c0_31] : memref<2x1x32xf32, #tpu.memory_space<vmem>>, vector<1x1x32xf32>
      %73 = vector.shape_cast %72 : vector<1x1x32xf32> to vector<1x32xf32>
      %74 = vector.shape_cast %70 : vector<1x32xf32> to vector<1x1x32xf32>
      tpu.vector_store %arg9[%71, %c0_30, %c0_31], %74 {strides = array<i32>} : memref<2x1x32xf32, #tpu.memory_space<vmem>>, vector<1x1x32xf32>,
    }
    %c2_i32_13 = arith.constant 2 : i32
    return
  }
  func.func @transform_0(%arg0: i32) -> (i32, i32, i32) {
    %c0_i32 = arith.constant 0 : i32
    %c0_i32_0 = arith.constant 0 : i32
    %c0_i32_1 = arith.constant 0 : i32
    return %arg0, %c0_i32, %c0_i32_0 : i32, i32, i32
  }
  func.func @transform_1(%arg0: i32) -> (i32, i32) {
    %c0_i32 = arith.constant 0 : i32
    %c0_i32_0 = arith.constant 0 : i32
    %c0_i32_1 = arith.constant 0 : i32
    return %c0_i32, %c0_i32_0 : i32, i32
  }
  func.func @transform_2(%arg0: i32) -> (i32, i32) {
    %c0_i32 = arith.constant 0 : i32
    %c0_i32_0 = arith.constant 0 : i32
    %c0_i32_1 = arith.constant 0 : i32
    return %c0_i32, %c0_i32_0 : i32, i32
  }
  func.func @transform_3(%arg0: i32) -> (i32, i32) {
    %c0_i32 = arith.constant 0 : i32
    %c0_i32_0 = arith.constant 0 : i32
    %c0_i32_1 = arith.constant 0 : i32
    return %c0_i32, %c0_i32_0 : i32, i32
  }
  func.func @transform_4(%arg0: i32) -> (i32, i32) {
    %c0_i32 = arith.constant 0 : i32
    %c0_i32_0 = arith.constant 0 : i32
    %c0_i32_1 = arith.constant 0 : i32
    return %c0_i32, %c0_i32_0 : i32, i32
  }
  func.func @transform_5(%arg0: i32) -> (i32, i32) {
    %c0_i32 = arith.constant 0 : i32
    %c0_i32_0 = arith.constant 0 : i32
    %c0_i32_1 = arith.constant 0 : i32
    return %c0_i32, %c0_i32_0 : i32, i32
  }
  func.func @transform_6(%arg0: i32) -> (i32, i32) {
    %c0_i32 = arith.constant 0 : i32
    %c0_i32_0 = arith.constant 0 : i32
    %c0_i32_1 = arith.constant 0 : i32
    return %c0_i32, %c0_i32_0 : i32, i32
  }
  func.func @transform_7(%arg0: i32) -> (i32, i32) {
    %c0_i32 = arith.constant 0 : i32
    %c0_i32_0 = arith.constant 0 : i32
    %c0_i32_1 = arith.constant 0 : i32
    return %c0_i32, %c0_i32_0 : i32, i32
  }
  func.func @transform_8(%arg0: i32) -> (i32, i32, i32) {
    %c0_i32 = arith.constant 0 : i32
    %c0_i32_0 = arith.constant 0 : i32
    %c0_i32_1 = arith.constant 0 : i32
    return %arg0, %c0_i32, %c0_i32_0 : i32, i32, i32
  }
}

</mosaic_0001>

<llo_original>
// kernel: tpu_custom_call.1
$region0: #{tpu_custom_call.1}
  #allocation0 [shape = 'u32[]', space=smem, size = 0x4, offset = 0x4, fixed_abs, tag = 'smem constant byte address 0x4 - core index']
  #allocation1 [shape = 'u32[72,128]{1,0:T(1,128)}', space=vmem, size = 0x9000, scoped, tag = 'internal scratch']
  %s0 = inlined_call_operand.vmem [shape: bf16[4,16,32], index: 0, kind: input, shape index: {}]
  %s1 = inlined_call_operand.vmem [shape: bf16[32,16], index: 1, kind: input, shape index: {}]
  %s2 = inlined_call_operand.vmem [shape: f32[32,32], index: 2, kind: input, shape index: {}]
  %s3 = inlined_call_operand.vmem [shape: f32[32,1], index: 3, kind: input, shape index: {}]
  %s4 = inlined_call_operand.vmem [shape: f32[32,1], index: 4, kind: input, shape index: {}]
  %s5 = inlined_call_operand.vmem [shape: f32[32,1], index: 5, kind: input, shape index: {}]
  %s6 = inlined_call_operand.vmem [shape: bf16[16,32], index: 6, kind: input, shape index: {}]
  %s7 = inlined_call_operand.vmem [shape: f32[16,1], index: 7, kind: input, shape index: {}]
  %s8 = inlined_call_operand.hbm [shape: f32[4,1,32], index: 8, kind: output, shape index: {}]
  %s9 = sld [smem:[#allocation0]]
  $region72: #{tpu_custom_call.1} parent=0
    _
  %s11 = ssub.s32 1, %s9
  %s12 = scalar_select 0, %s11, %s9
  $region1: #{tpu_custom_call.1} parent=0
    #allocation2 [shape = 'u8[2048]{0}', space=vmem, size = 0x800, scoped, tag = 'output window, operand 0']
    #allocation3 [shape = 's32[2]{0}', space=sflag, size = 0x8, scoped, tag = 'scoped memory for tpu_custom_call.1']
    %13 = vsyncpa [#allocation3], 0
    %s14 = scalar_lea.sflag [#allocation3], 1
    %15 = vsyncpa %s14, 0
    loop: start=0, step=1, limit=4
    $region2: #{tpu_custom_call.1} parent=1 // loop_pre_header
      _
    $region3: #{tpu_custom_call.1} parent=1 // loop_header
      %s17 = sphi 0, %s21
      %p18 = scmp.ge.s32.totalorder %s17, 4
      %s27 = sphi 0, %s29
      %s30 = sphi 0, %s27
      %s31 = sphi 0, %s30
      %s47 = sphi 0, %s31
      %s51 = sphi 0, %s51
      %s53 = sphi 0, %s51
      %s54 = sphi 0, %s53
      %s68 = sphi 0, %s54
      %s72 = sphi 0, %s72
      %s74 = sphi 0, %s72
      %s75 = sphi 0, %s74
      %s89 = sphi 0, %s75
      %s93 = sphi 0, %s93
      %s95 = sphi 0, %s93
      %s96 = sphi 0, %s95
      %s110 = sphi 0, %s96
      %s114 = sphi 0, %s114
      %s116 = sphi 0, %s114
      %s117 = sphi 0, %s116
      %s131 = sphi 0, %s117
      %s135 = sphi 0, %s135
      %s137 = sphi 0, %s135
      %s138 = sphi 0, %s137
      %s152 = sphi 0, %s138
      %s156 = sphi 0, %s156
      %s158 = sphi 0, %s156
      %s159 = sphi 0, %s158
      %s173 = sphi 0, %s159
      %s177 = sphi 0, %s177
      %s179 = sphi 0, %s177
      %s180 = sphi 0, %s179
      %s194 = sphi 0, %s180
      %s200 = sphi 0, %s202
      %s203 = sphi 0, %s200
      %s204 = sphi 0, %s203
      %s220 = sphi 0, %s204
    $region4: #{tpu_custom_call.1} parent=1 // loop_header_branch
      %20 = sbr.rel (%p18) target = $region8
    $region5: #{tpu_custom_call.1} parent=1 // loop_body
      %s22 = ssub.s32 %s17, 1
      %s23 = ssub.s32 %s17, 2
      %s24 = sadd.s32 %s17, 1
      %s25 = ssub.s32 %s17, %s24
      %p26 = scmp.eq.s32.totalorder %s25, 0
      %s28 = sadd.s32 %s27, 1
      %s29 = scalar_select %p26, %s27, %s28
      %p32 = pneg %p26
      %p33 = scmp.eq.s32.totalorder %s17, 1
      %p34 = por %p32, %p33
      %p35 = scmp.ne.s32.totalorder %s27, %s30
      %p36 = scmp.eq.s32.totalorder %s17, 0
      %p37 = por %p35, %p36
      %p38 = scmp.ne.s32.totalorder %s27, %s30
      %p39 = scmp.eq.s32.totalorder %s22, 1
      %p40 = por %p38, %p39
      %p41 = scmp.ne.s32.totalorder %s30, %s31
      %p42 = scmp.eq.s32.totalorder %s22, 0
      %p43 = por %p41, %p42
      %p44 = scmp.ne.s32.totalorder %s30, %s31
      %p45 = scmp.eq.s32.totalorder %s23, 1
      %p46 = por %p44, %p45
      %p48 = scmp.ne.s32.totalorder %s31, %s47
      %p49 = scmp.eq.s32.totalorder %s23, 0
      %p50 = por %p48, %p49
      %s52 = sadd.s32 %s51, 1
      %p55 = scmp.eq.s32.totalorder %s17, 1
      %p56 = scmp.ne.s32.totalorder %s51, %s53
      %p57 = scmp.eq.s32.totalorder %s17, 0
      %p58 = por %p56, %p57
      %p59 = scmp.ne.s32.totalorder %s51, %s53
      %p60 = scmp.eq.s32.totalorder %s22, 1
      %p61 = por %p59, %p60
      %p62 = scmp.ne.s32.totalorder %s53, %s54
      %p63 = scmp.eq.s32.totalorder %s22, 0
      %p64 = por %p62, %p63
      %p65 = scmp.ne.s32.totalorder %s53, %s54
      %p66 = scmp.eq.s32.totalorder %s23, 1
      %p67 = por %p65, %p66
      %p69 = scmp.ne.s32.totalorder %s54, %s68
      %p70 = scmp.eq.s32.totalorder %s23, 0
      %p71 = por %p69, %p70
      %s73 = sadd.s32 %s72, 1
      %p76 = scmp.eq.s32.totalorder %s17, 1
      %p77 = scmp.ne.s32.totalorder %s72, %s74
      %p78 = scmp.eq.s32.totalorder %s17, 0
      %p79 = por %p77, %p78
      %p80 = scmp.ne.s32.totalorder %s72, %s74
      %p81 = scmp.eq.s32.totalorder %s22, 1
      %p82 = por %p80, %p81
      %p83 = scmp.ne.s32.totalorder %s74, %s75
      %p84 = scmp.eq.s32.totalorder %s22, 0
      %p85 = por %p83, %p84
      %p86 = scmp.ne.s32.totalorder %s74, %s75
      %p87 = scmp.eq.s32.totalorder %s23, 1
      %p88 = por %p86, %p87
      %p90 = scmp.ne.s32.totalorder %s75, %s89
      %p91 = scmp.eq.s32.totalorder %s23, 0
      %p92 = por %p90, %p91
      %s94 = sadd.s32 %s93, 1
      %p97 = scmp.eq.s32.totalorder %s17, 1
      %p98 = scmp.ne.s32.totalorder %s93, %s95
      %p99 = scmp.eq.s32.totalorder %s17, 0
      %p100 = por %p98, %p99
      %p101 = scmp.ne.s32.totalorder %s93, %s95
      %p102 = scmp.eq.s32.totalorder %s22, 1
      %p103 = por %p101, %p102
      %p104 = scmp.ne.s32.totalorder %s95, %s96
      %p105 = scmp.eq.s32.totalorder %s22, 0
      %p106 = por %p104, %p105
      %p107 = scmp.ne.s32.totalorder %s95, %s96
      %p108 = scmp.eq.s32.totalorder %s23, 1
      %p109 = por %p107, %p108
      %p111 = scmp.ne.s32.totalorder %s96, %s110
      %p112 = scmp.eq.s32.totalorder %s23, 0
      %p113 = por %p111, %p112
      %s115 = sadd.s32 %s114, 1
      %p118 = scmp.eq.s32.totalorder %s17, 1
      %p119 = scmp.ne.s32.totalorder %s114, %s116
      %p120 = scmp.eq.s32.totalorder %s17, 0
      %p121 = por %p119, %p120
      %p122 = scmp.ne.s32.totalorder %s114, %s116
      %p123 = scmp.eq.s32.totalorder %s22, 1
      %p124 = por %p122, %p123
      %p125 = scmp.ne.s32.totalorder %s116, %s117
      %p126 = scmp.eq.s32.totalorder %s22, 0
      %p127 = por %p125, %p126
      %p128 = scmp.ne.s32.totalorder %s116, %s117
      %p129 = scmp.eq.s32.totalorder %s23, 1
      %p130 = por %p128, %p129
      %p132 = scmp.ne.s32.totalorder %s117, %s131
      %p133 = scmp.eq.s32.totalorder %s23, 0
      %p134 = por %p132, %p133
      %s136 = sadd.s32 %s135, 1
      %p139 = scmp.eq.s32.totalorder %s17, 1
      %p140 = scmp.ne.s32.totalorder %s135, %s137
      %p141 = scmp.eq.s32.totalorder %s17, 0
      %p142 = por %p140, %p141
      %p143 = scmp.ne.s32.totalorder %s135, %s137
      %p144 = scmp.eq.s32.totalorder %s22, 1
      %p145 = por %p143, %p144
      %p146 = scmp.ne.s32.totalorder %s137, %s138
      %p147 = scmp.eq.s32.totalorder %s22, 0
      %p148 = por %p146, %p147
      %p149 = scmp.ne.s32.totalorder %s137, %s138
      %p150 = scmp.eq.s32.totalorder %s23, 1
      %p151 = por %p149, %p150
      %p153 = scmp.ne.s32.totalorder %s138, %s152
      %p154 = scmp.eq.s32.totalorder %s23, 0
      %p155 = por %p153, %p154
      %s157 = sadd.s32 %s156, 1
      %p160 = scmp.eq.s32.totalorder %s17, 1
      %p161 = scmp.ne.s32.totalorder %s156, %s158
      %p162 = scmp.eq.s32.totalorder %s17, 0
      %p163 = por %p161, %p162
      %p164 = scmp.ne.s32.totalorder %s156, %s158
      %p165 = scmp.eq.s32.totalorder %s22, 1
      %p166 = por %p164, %p165
      %p167 = scmp.ne.s32.totalorder %s158, %s159
      %p168 = scmp.eq.s32.totalorder %s22, 0
      %p169 = por %p167, %p168
      %p170 = scmp.ne.s32.totalorder %s158, %s159
      %p171 = scmp.eq.s32.totalorder %s23, 1
      %p172 = por %p170, %p171
      %p174 = scmp.ne.s32.totalorder %s159, %s173
      %p175 = scmp.eq.s32.totalorder %s23, 0
      %p176 = por %p174, %p175
      %s178 = sadd.s32 %s177, 1
      %p181 = scmp.eq.s32.totalorder %s17, 1
      %p182 = scmp.ne.s32.totalorder %s177, %s179
      %p183 = scmp.eq.s32.totalorder %s17, 0
      %p184 = por %p182, %p183
      %p185 = scmp.ne.s32.totalorder %s177, %s179
      %p186 = scmp.eq.s32.totalorder %s22, 1
      %p187 = por %p185, %p186
      %p188 = scmp.ne.s32.totalorder %s179, %s180
      %p189 = scmp.eq.s32.totalorder %s22, 0
      %p190 = por %p188, %p189
      %p191 = scmp.ne.s32.totalorder %s179, %s180
      %p192 = scmp.eq.s32.totalorder %s23, 1
      %p193 = por %p191, %p192
      %p195 = scmp.ne.s32.totalorder %s180, %s194
      %p196 = scmp.eq.s32.totalorder %s23, 0
      %p197 = por %p195, %p196
      %s198 = ssub.s32 %s17, %s24
      %p199 = scmp.eq.s32.totalorder %s198, 0
      %s201 = sadd.s32 %s200, 1
      %s202 = scalar_select %p199, %s200, %s201
      %p205 = pneg %p199
      %p206 = scmp.eq.s32.totalorder %s17, 1
      %p207 = por %p205, %p206
      %p208 = scmp.ne.s32.totalorder %s200, %s203
      %p209 = scmp.eq.s32.totalorder %s17, 0
      %p210 = por %p208, %p209
      %p211 = scmp.ne.s32.totalorder %s200, %s203
      %p212 = scmp.eq.s32.totalorder %s22, 1
      %p213 = por %p211, %p212
      %p214 = scmp.ne.s32.totalorder %s203, %s204
      %p215 = scmp.eq.s32.totalorder %s22, 0
      %p216 = por %p214, %p215
      %p217 = scmp.ne.s32.totalorder %s203, %s204
      %p218 = scmp.eq.s32.totalorder %s23, 1
      %p219 = por %p217, %p218
      %p221 = scmp.ne.s32.totalorder %s204, %s220
      %p222 = scmp.eq.s32.totalorder %s23, 0
      %p223 = por %p221, %p222
      %p224 = scmp.le.s32.totalorder 1, %s17
      %p225 = scmp.lt.s32.totalorder %s17, 3
      %p226 = pnand %p224, %p225
      %p227 = pneg %p226
      // Predicated region
      $region9: #{tpu_custom_call.1} parent=5 // pred_check
        _
      $region10: #{tpu_custom_call.1} parent=5 // pred_check_branch
        %229 = sbr.rel (%p226) target = $region12
      $region11: #{tpu_custom_call.1} parent=5 // pred_region
        %s230 = ssub.s32 %s17, 1
        // Predicated region
        $region13: #{tpu_custom_call.1} parent=11 // pred_check
          %p231 = pneg %p64
        $region14: #{tpu_custom_call.1} parent=11 // pred_check_branch
          %233 = sbr.rel (%p231) target = $region16
        $region15: #{tpu_custom_call.1} parent=11 // pred_region
          _
        $region16: #{tpu_custom_call.1} parent=11 // pred_fallthru
          _
        // Predicated region
        $region17: #{tpu_custom_call.1} parent=11 // pred_check
          %p234 = pneg %p85
        $region18: #{tpu_custom_call.1} parent=11 // pred_check_branch
          %236 = sbr.rel (%p234) target = $region20
        $region19: #{tpu_custom_call.1} parent=11 // pred_region
          _
        $region20: #{tpu_custom_call.1} parent=11 // pred_fallthru
          _
        // Predicated region
        $region21: #{tpu_custom_call.1} parent=11 // pred_check
          %p237 = pneg %p106
        $region22: #{tpu_custom_call.1} parent=11 // pred_check_branch
          %239 = sbr.rel (%p237) target = $region24
        $region23: #{tpu_custom_call.1} parent=11 // pred_region
          _
        $region24: #{tpu_custom_call.1} parent=11 // pred_fallthru
          _
        // Predicated region
        $region25: #{tpu_custom_call.1} parent=11 // pred_check
          %p240 = pneg %p127
        $region26: #{tpu_custom_call.1} parent=11 // pred_check_branch
          %242 = sbr.rel (%p240) target = $region28
        $region27: #{tpu_custom_call.1} parent=11 // pred_region
          _
        $region28: #{tpu_custom_call.1} parent=11 // pred_fallthru
          _
        // Predicated region
        $region29: #{tpu_custom_call.1} parent=11 // pred_check
          %p243 = pneg %p148
        $region30: #{tpu_custom_call.1} parent=11 // pred_check_branch
          %245 = sbr.rel (%p243) target = $region32
        $region31: #{tpu_custom_call.1} parent=11 // pred_region
          _
        $region32: #{tpu_custom_call.1} parent=11 // pred_fallthru
          _
        // Predicated region
        $region33: #{tpu_custom_call.1} parent=11 // pred_check
          %p246 = pneg %p169
        $region34: #{tpu_custom_call.1} parent=11 // pred_check_branch
          %248 = sbr.rel (%p246) target = $region36
        $region35: #{tpu_custom_call.1} parent=11 // pred_region
          _
        $region36: #{tpu_custom_call.1} parent=11 // pred_fallthru
          _
        // Predicated region
        $region37: #{tpu_custom_call.1} parent=11 // pred_check
          %p249 = pneg %p190
        $region38: #{tpu_custom_call.1} parent=11 // pred_check_branch
          %251 = sbr.rel (%p249) target = $region40
        $region39: #{tpu_custom_call.1} parent=11 // pred_region
          _
        $region40: #{tpu_custom_call.1} parent=11 // pred_fallthru
          _
      $region12: #{tpu_custom_call.1} parent=5 // pred_fallthru
        _
      %p252 = scmp.lt.s32.totalorder %s17, 2
      // Predicated region
      $region41: #{tpu_custom_call.1} parent=5 // pred_check
        %p253 = pneg %p252
      $region42: #{tpu_custom_call.1} parent=5 // pred_check_branch
        %255 = sbr.rel (%p253) target = $region44
      $region43: #{tpu_custom_call.1} parent=5 // pred_region
        // Predicated region
        $region45: #{tpu_custom_call.1} parent=43 // pred_check
          %p256 = pneg %p37
        $region46: #{tpu_custom_call.1} parent=43 // pred_check_branch
          %258 = sbr.rel (%p256) target = $region48
        $region47: #{tpu_custom_call.1} parent=43 // pred_region
          %s259 = smul.u32 2, %s17
          %p260 = scmp.lt.s32.totalorder %s259, 3
          %s261 = scalar_select %p260, %s259, 3
          %s262 = smul.addr %s261, 2
          %s263 = smul.addr %s262, 4
          %s264 = scalar_lea.vmem %s0, %s263
          %s265 = smul.u32 2, %s17
        $region48: #{tpu_custom_call.1} parent=43 // pred_fallthru
          _
      $region44: #{tpu_custom_call.1} parent=5 // pred_fallthru
        _
      %p266 = scmp.le.s32.totalorder 1, %s17
      %p267 = scmp.lt.s32.totalorder %s17, 3
      %p268 = pnand %p266, %p267
      %p269 = pneg %p268
      // Predicated region
      $region49: #{tpu_custom_call.1} parent=5 // pred_check
        _
      $region50: #{tpu_custom_call.1} parent=5 // pred_check_branch
        %271 = sbr.rel (%p268) target = $region52
      $region51: #{tpu_custom_call.1} parent=5 // pred_region
        %s272 = ssub.s32 %s17, 1
        %s273 = smul.u32 2, %s22
        %p274 = scmp.lt.s32.totalorder %s273, 3
        %s275 = scalar_select %p274, %s273, 3
        %s276 = smul.addr %s275, 2
        %s277 = smul.addr %s276, 4
        %s278 = scalar_lea.vmem %s0, %s277
        %p279 = pneg %p43
        %p280 = pneg %p40
        %p281 = pneg %p64
        %p282 = pneg %p61
        %p283 = pneg %p85
        %p284 = pneg %p82
        %p285 = pneg %p106
        %p286 = pneg %p103
        %p287 = pneg %p127
        %p288 = pneg %p124
        %p289 = pneg %p148
        %p290 = pneg %p145
        %p291 = pneg %p169
        %p292 = pneg %p166
        %p293 = pneg %p190
        %p294 = pneg %p187
        %p295 = pneg %p216
        %p296 = pneg %p213
        %s297 = sand.u32 %s203, 1
        %s298 = scalar_lea.sflag [#allocation3], %s297
        %s299 = sand.u32 %s203, 1
        %s300 = smul.addr %s299, 2
        %s301 = scalar_lea.vmem [#allocation2], %s300
        %s302 = smul.u32 2, %s22
        %p303 = scmp.lt.s32.totalorder %s302, 3
        %s304 = scalar_select %p303, %s302, 3
        %s305 = smul.addr %s304, 2
        %s306 = smul.addr %s305, 4
        %s307 = scalar_lea.vmem %s0, %s306
        %s308 = smul.u32 2, %s22
        %s309 = smul.u32 2, %s22
        %v311 = vld [vmem:[%s1] sm:$0xf]
        %v312 = vld [vmem:[%s1 + $0x4] sm:$0xf]
        %v313 = vld [vmem:[%s1 + $0x8] sm:$0xf]
        %v314 = vld [vmem:[%s1 + $0xc] sm:$0xf]
        %v315 = vld [vmem:[%s2] sm:$0xff]
        %v316 = vld [vmem:[%s2 + $0x8] sm:$0xff]
        %v317 = vld [vmem:[%s2 + $0x10] sm:$0xff]
        %v318 = vld [vmem:[%s2 + $0x18] sm:$0xff]
        %v319 = vld [vmem:[%s6] sm:$0xf]
        %v320 = vld [vmem:[%s6 + $0x4] sm:$0xf]
        %v321 = vld [vmem:[%s3] sm:$0xff]
        %v322 = vld [vmem:[%s3 + $0x8] sm:$0xff]
        %v323 = vld [vmem:[%s3 + $0x10] sm:$0xff]
        %v324 = vld [vmem:[%s3 + $0x18] sm:$0xff]
        %v325 = vld [vmem:[%s4] sm:$0xff]
        %v326 = vld [vmem:[%s4 + $0x8] sm:$0xff]
        %v327 = vld [vmem:[%s4 + $0x10] sm:$0xff]
        %v328 = vld [vmem:[%s4 + $0x18] sm:$0xff]
        %v329 = vld [vmem:[%s5] sm:$0xff]
        %v330 = vld [vmem:[%s5 + $0x8] sm:$0xff]
        %v331 = vld [vmem:[%s5 + $0x10] sm:$0xff]
        %v332 = vld [vmem:[%s5 + $0x18] sm:$0xff]
        %v333 = vld [vmem:[%s7] sm:$0xff]
        %v334 = vld [vmem:[%s7 + $0x8] sm:$0xff]
        loop: start=0, step=1, limit=2
        $region53: #{tpu_custom_call.1} parent=51 // loop_pre_header
          _
        $region54: #{tpu_custom_call.1} parent=51 // loop_header
          %s336 = sphi 0, %s340
          %p337 = scmp.ge.s32.totalorder %s336, 2
        $region55: #{tpu_custom_call.1} parent=51 // loop_header_branch
          %339 = sbr.rel (%p337) target = $region59
        $region56: #{tpu_custom_call.1} parent=51 // loop_body
          %s341 = smul.u32 %s336, 2
          %s342 = smul.addr %s341, 4
          %s343 = scalar_lea.vmem %s307, %s342
          %v344 = vld [vmem:[%s343] sm:$0xf]
          %v345 = vld [vmem:[%s343 + $0x4] sm:$0xf]
          %v346 = vunpack.c.l.bf16 %v344
          %v347 = vunpack.c.l.bf16 %v345
          %vm348 = vcmask 261120
          %v349 = vsel %vm348, %v346, 0.0
          %350 = vadd.xlane.f32.xlu0 %v349
          %v351 = vpop.xlane.xlu0 %350
          %v352 = vsel %vm348, %v347, 0.0
          %353 = vadd.xlane.f32.xlu0 %v352
          %v354 = vpop.xlane.xlu0 %353
          %v355 = vmul.f32 %v351, 0.03125
          %v356 = vmul.f32 %v354, 0.03125
          %v357 = vsub.f32 %v346, %v355
          %v358 = vsub.f32 %v347, %v356
          %v359 = vmul.f32 %v357, %v357
          %v360 = vmul.f32 %v358, %v358
          %v361 = vsel %vm348, %v359, 0.0
          %362 = vadd.xlane.f32.xlu0 %v361
          %v363 = vpop.xlane.xlu0 %362
          %v364 = vsel %vm348, %v360, 0.0
          %365 = vadd.xlane.f32.xlu0 %v364
          %v366 = vpop.xlane.xlu0 %365
          %v367 = vmul.f32 %v363, 0.03125
          %v368 = vmul.f32 %v366, 0.03125
          %v369 = vmax.f32 %v367, 1e-12
          %v370 = vmax.f32 %v368, 1e-12
          %v371 = vrsqrt.pop %v369
          %v372 = vmul.f32 %v371, %v369
          %v373 = vmul.f32 %v372, %v371
          %v374 = vmul.f32 0.5, %v373
          %v375 = vsub.f32 1.5, %v374
          %v376 = vmul.f32 %v371, %v375
          %v377 = vmul.f32 %v369, %v376
          %vm378 = vcmp.eq.f32.partialorder %v369, inf
          %v379 = vsel %vm378, %v369, %v377
          %vm380 = vcmp.eq.f32.partialorder %v369, 0.0
          %v381 = vand.u32 %v369, 2147483648
          %v382 = vsel %vm380, %v381, %v379
          %v383 = vrsqrt.pop %v370
          %v384 = vmul.f32 %v383, %v370
          %v385 = vmul.f32 %v384, %v383
          %v386 = vmul.f32 0.5, %v385
          %v387 = vsub.f32 1.5, %v386
          %v388 = vmul.f32 %v383, %v387
          %v389 = vmul.f32 %v370, %v388
          %vm390 = vcmp.eq.f32.partialorder %v370, inf
          %v391 = vsel %vm390, %v370, %v389
          %vm392 = vcmp.eq.f32.partialorder %v370, 0.0
          %v393 = vand.u32 %v370, 2147483648
          %v394 = vsel %vm392, %v393, %v391
          %v396 = vsel %vm348, %v315, 0
          %v399 = vsel %vm348, %v316, 0
          %v402 = vsel %vm348, %v317, 0
          %v405 = vsel %vm348, %v318, 0
          %407 = vmatpush.msra.mxu0 0.0
          %408 = vmatpush.msra.mxu0 0.0
          %409 = vmatpush.msra.mxu0 0.0
          %410 = vmatpush.msra.mxu0 0.0
          %411 = vmatpush.msra.mxu0 0.0
          %412 = vmatpush.msra.mxu0 0.0
          %413 = vmatpush.msra.mxu0 0.0
          %414 = vmatpush.msra.mxu0 0.0
          %415 = vmatpush.msra.mxu0 0.0
          %416 = vmatpush.msra.mxu0 0.0
          %417 = vmatpush.msra.mxu0 0.0
          %418 = vmatpush.msra.mxu0 0.0
          %419 = vmatpush.msra.mxu0 %v394
          %420 = vmatpush.msra.mxu0 %v382
          %421 = vmatpush.msra.mxu0 %v356
          %422 = vmatpush.msra.mxu0 %v355
          %423 = vmatmul.f32.gmra.mxu0 %v396
          %v424 = vpop.f32.mrf.mxu0
          %v425 = vadd.f32 %v321, %v424
          %426 = vmatmul.f32.gmra.mxu0 %v399
          %v427 = vpop.f32.mrf.mxu0
          %v428 = vadd.f32 %v322, %v427
          %429 = vmatmul.f32.gmra.mxu0 %v402
          %v430 = vpop.f32.mrf.mxu0
          %v431 = vadd.f32 %v323, %v430
          %432 = vmatmul.f32.gmra.mxu0 %v405
          %v433 = vpop.f32.mrf.mxu0
          %v434 = vadd.f32 %v324, %v433
          %435 = vdwg.mxu0
          %437 = vset.pattern.permute.xlu0 0
          %438 = vperm.xlu0 %437, %v425
          %v439 = vpop.permute.xlu0 %438
          %442 = vset.pattern.permute.xlu0 0
          %443 = vperm.xlu0 %442, %v428
          %v444 = vpop.permute.xlu0 %443
          %447 = vset.pattern.permute.xlu0 0
          %448 = vperm.xlu0 %447, %v431
          %v449 = vpop.permute.xlu0 %448
          %452 = vset.pattern.permute.xlu0 0
          %453 = vperm.xlu0 %452, %v434
          %v454 = vpop.permute.xlu0 %453
          %v460 = vunpack.c.l.b16 %v311
          %v461 = vunpack.c.l.b16 %v312
          %v462 = vunpack.c.l.b16 %v313
          %v463 = vunpack.c.l.b16 %v314
          %v464 = vpack.c.b16 %v461, %v460
          %v465 = vpack.c.b16 %v463, %v462
          %v468 = vunpack.c.l.b16 %v344
          %v469 = vunpack.c.l.b16 %v345
          %v470 = vpack.c.b16 %v469, %v468
          %vm472 = vcmask 130048
          %v474 = vsel %vm472, %v464, 0
          %v477 = vsel %vm472, %v465, 0
          %479 = vmatpush.bf16.msra.mxu0 0
          %480 = vmatpush.bf16.msra.mxu0 0
          %481 = vmatpush.bf16.msra.mxu0 0
          %482 = vmatpush.bf16.msra.mxu0 0
          %483 = vmatpush.bf16.msra.mxu0 0
          %484 = vmatpush.bf16.msra.mxu0 0
          %485 = vmatpush.bf16.msra.mxu0 0
          %486 = vmatpush.bf16.msra.mxu0 %v470
          %487 = vmatmul.bf16.gmra.mxu0 %v474
          %v488 = vpop.f32.mrf.mxu0
          %v489 = vadd.f32 %v439, %v488
          %v490 = vpop.f32.mrf.mxu0
          %v491 = vadd.f32 %v444, %v490
          %492 = vmatmul.bf16.gmra.mxu0 %v477
          %v493 = vpop.f32.mrf.mxu0
          %v494 = vadd.f32 %v449, %v493
          %v495 = vpop.f32.mrf.mxu0
          %v496 = vadd.f32 %v454, %v495
          %497 = vdwg.mxu0
          %v498 = vmax.f32 %v489, 0.0
          %v499 = vmax.f32 %v491, 0.0
          %v500 = vmax.f32 %v494, 0.0
          %v501 = vmax.f32 %v496, 0.0
          %503 = vset.pattern.permute.xlu0 0
          %504 = vperm.xlu0 %503, %v325
          %v505 = vpop.permute.xlu0 %504
          %508 = vset.pattern.permute.xlu0 0
          %509 = vperm.xlu0 %508, %v326
          %v510 = vpop.permute.xlu0 %509
          %513 = vset.pattern.permute.xlu0 0
          %514 = vperm.xlu0 %513, %v327
          %v515 = vpop.permute.xlu0 %514
          %518 = vset.pattern.permute.xlu0 0
          %519 = vperm.xlu0 %518, %v328
          %v520 = vpop.permute.xlu0 %519
          %v522 = vmul.f32 %v498, %v505
          %v523 = vmul.f32 %v499, %v510
          %v524 = vmul.f32 %v500, %v515
          %v525 = vmul.f32 %v501, %v520
          %527 = vset.pattern.permute.xlu0 0
          %528 = vperm.xlu0 %527, %v329
          %v529 = vpop.permute.xlu0 %528
          %532 = vset.pattern.permute.xlu0 0
          %533 = vperm.xlu0 %532, %v330
          %v534 = vpop.permute.xlu0 %533
          %537 = vset.pattern.permute.xlu0 0
          %538 = vperm.xlu0 %537, %v331
          %v539 = vpop.permute.xlu0 %538
          %542 = vset.pattern.permute.xlu0 0
          %543 = vperm.xlu0 %542, %v332
          %v544 = vpop.permute.xlu0 %543
          %v546 = vadd.f32 %v522, %v529
          %v547 = vadd.f32 %v523, %v534
          %v548 = vadd.f32 %v524, %v539
          %v549 = vadd.f32 %v525, %v544
          %v550 = vtanh.pop %v546
          %v551 = vtanh.pop %v547
          %v552 = vtanh.pop %v548
          %v553 = vtanh.pop %v549
          %v554 = vpack.c.bf16 %v551, %v550
          %v555 = vpack.c.bf16 %v553, %v552
          %557 = vset.pattern.permute.xlu0 0
          %558 = vperm.xlu0 %557, %v333
          %v559 = vpop.permute.xlu0 %558
          %562 = vset.pattern.permute.xlu0 0
          %563 = vperm.xlu0 %562, %v334
          %v564 = vpop.permute.xlu0 %563
          %v568 = vunpack.c.l.b16 %v319
          %v569 = vunpack.c.l.b16 %v320
          %v570 = vpack.c.b16 %v569, %v568
          %v572 = vsel %vm348, %v570, 0
          %574 = vmatpush.bf16.msra.mxu0 0
          %575 = vmatpush.bf16.msra.mxu0 0
          %576 = vmatpush.bf16.msra.mxu0 0
          %577 = vmatpush.bf16.msra.mxu0 0
          %578 = vmatpush.bf16.msra.mxu0 0
          %579 = vmatpush.bf16.msra.mxu0 0
          %580 = vmatpush.bf16.msra.mxu0 %v555
          %581 = vmatpush.bf16.msra.mxu0 %v554
          %582 = vmatmul.bf16.gmra.mxu0 %v572
          %v583 = vpop.f32.mrf.mxu0
          %v584 = vadd.f32 %v559, %v583
          %v585 = vpop.f32.mrf.mxu0
          %v586 = vadd.f32 %v564, %v585
          %587 = vdwg.mxu0
          %v588 = vsel %vm348, %v584, -inf
          %589 = vmax.xlane.f32.xlu0 %v588
          %v590 = vpop.xlane.xlu0 %589
          %v591 = vsel %vm348, %v586, -inf
          %592 = vmax.xlane.f32.xlu0 %v591
          %v593 = vpop.xlane.xlu0 %592
          %v594 = vsub.f32 %v584, %v590
          %v595 = vsub.f32 %v586, %v593
          %v596 = vmul.f32 %v594, 1.442695
          %v597 = vpow.pop %v596
          %v598 = vmul.f32 %v595, 1.442695
          %v599 = vpow.pop %v598
          %v600 = vsel %vm348, %v597, 0.0
          %601 = vadd.xlane.f32.xlu0 %v600
          %v602 = vpop.xlane.xlu0 %601
          %v603 = vsel %vm348, %v599, 0.0
          %604 = vadd.xlane.f32.xlu0 %v603
          %v605 = vpop.xlane.xlu0 %604
          %v606 = vrcp.pop %v602
          %v607 = vmul.f32 %v602, %v606
          %v608 = vsub.f32 1.0, %v607
          %v609 = vmul.f32 %v606, %v608
          %v610 = vadd.f32 %v606, %v609
          %vm611 = vweird.f32 %v602
          %vm612 = vweird.f32 %v606
          %vm613 = vmor %vm611, %vm612
          %v614 = vsel %vm613, %v606, %v610
          %v615 = vand.u32 2147483647, %v602
          %vm616 = vcmp.eq.f32.partialorder %v615, 8.507059e+37
          %v617 = vand.u32 %v602, 2147483648
          %v618 = vor.u32 1.1754944e-38, %v617
          %v619 = vsel %vm616, %v618, %v614
          %v620 = vmul.f32 1.0, %v619
          %v621 = vrcp.pop %v605
          %v622 = vmul.f32 %v605, %v621
          %v623 = vsub.f32 1.0, %v622
          %v624 = vmul.f32 %v621, %v623
          %v625 = vadd.f32 %v621, %v624
          %vm626 = vweird.f32 %v605
          %vm627 = vweird.f32 %v621
          %vm628 = vmor %vm626, %vm627
          %v629 = vsel %vm628, %v621, %v625
          %v630 = vand.u32 2147483647, %v605
          %vm631 = vcmp.eq.f32.partialorder %v630, 8.507059e+37
          %v632 = vand.u32 %v605, 2147483648
          %v633 = vor.u32 1.1754944e-38, %v632
          %v634 = vsel %vm631, %v633, %v629
          %v635 = vmul.f32 1.0, %v634
          %v636 = vmul.f32 %v597, %v346
          %v637 = vmul.f32 %v599, %v347
          %v638 = vsel %vm348, %v636, 0.0
          %639 = vadd.xlane.f32.xlu0 %v638
          %v640 = vpop.xlane.xlu0 %639
          %v641 = vsel %vm348, %v637, 0.0
          %642 = vadd.xlane.f32.xlu0 %v641
          %v643 = vpop.xlane.xlu0 %642
          %v644 = vmul.f32 %v640, %v620
          %v645 = vmul.f32 %v643, %v635
          %v646 = vsub.f32 %v346, %v644
          %v647 = vsub.f32 %v347, %v645
          %v648 = vmul.f32 %v646, %v646
          %v649 = vmul.f32 %v647, %v647
          %v650 = vmul.f32 %v597, %v648
          %v651 = vmul.f32 %v599, %v649
          %v652 = vsel %vm348, %v650, 0.0
          %653 = vadd.xlane.f32.xlu0 %v652
          %v654 = vpop.xlane.xlu0 %653
          %v655 = vsel %vm348, %v651, 0.0
          %656 = vadd.xlane.f32.xlu0 %v655
          %v657 = vpop.xlane.xlu0 %656
          %v658 = vmul.f32 %v654, %v620
          %v659 = vmul.f32 %v657, %v635
          %v660 = vmax.f32 %v658, 1e-12
          %v661 = vmax.f32 %v659, 1e-12
          %v662 = vrsqrt.pop %v660
          %v663 = vmul.f32 %v662, %v660
          %v664 = vmul.f32 %v663, %v662
          %v665 = vmul.f32 0.5, %v664
          %v666 = vsub.f32 1.5, %v665
          %v667 = vmul.f32 %v662, %v666
          %v668 = vmul.f32 %v660, %v667
          %vm669 = vcmp.eq.f32.partialorder %v660, inf
          %v670 = vsel %vm669, %v660, %v668
          %vm671 = vcmp.eq.f32.partialorder %v660, 0.0
          %v672 = vand.u32 %v660, 2147483648
          %v673 = vsel %vm671, %v672, %v670
          %v674 = vrsqrt.pop %v661
          %v675 = vmul.f32 %v674, %v661
          %v676 = vmul.f32 %v675, %v674
          %v677 = vmul.f32 0.5, %v676
          %v678 = vsub.f32 1.5, %v677
          %v679 = vmul.f32 %v674, %v678
          %v680 = vmul.f32 %v661, %v679
          %vm681 = vcmp.eq.f32.partialorder %v661, inf
          %v682 = vsel %vm681, %v661, %v680
          %vm683 = vcmp.eq.f32.partialorder %v661, 0.0
          %v684 = vand.u32 %v661, 2147483648
          %v685 = vsel %vm683, %v684, %v682
          %v688 = vlaneseq
          %v689 = vand.u32 %v688, 127
          %v690 = vperm.slane %v644, %v689
          %v691 = vadd.s32 %v689, 4294967288
          %v692 = vperm.slane %v645, %v691
          %vm693 = vcmask 130112
          %v694 = vsel %vm693, %v692, %v690
          %v698 = vadd.s32 %v689, 4294967280
          %v699 = vperm.slane %v673, %v698
          %v700 = vadd.s32 %v689, 4294967272
          %v701 = vperm.slane %v685, %v700
          %vm702 = vcmask 261312
          %v703 = vsel %vm702, %v701, %v699
          %v705 = vsel %vm472, %v694, %v703
          %s706 = scalar_lea.vmem %s301, %s336 [#allocation2]
          %vm707 = vcmask 253952
          %708 = vst.msk [vmem:[%s706] sm:$0x1] %vm707, %v705
        $region57: #{tpu_custom_call.1} parent=51 // loop_footer
          %s340 = sadd.s32 1, %s336
        $region58: #{tpu_custom_call.1} parent=51 // loop_footer_branch
          %335 = sbr.rel target = $region54
        $region59: #{tpu_custom_call.1} parent=51 // loop_exit
          _
        %s709 = sand.u32 %s203, 1
        %s710 = scalar_lea.sflag [#allocation3], %s709
        %s711 = sand.u32 %s203, 1
        %s712 = smul.addr %s711, 2
        %s713 = scalar_lea.vmem [#allocation2], %s712
        // Predicated region
        $region60: #{tpu_custom_call.1} parent=51 // pred_check
          %p714 = pneg %p213
        $region61: #{tpu_custom_call.1} parent=51 // pred_check_branch
          %716 = sbr.rel (%p714) target = $region63
        $region62: #{tpu_custom_call.1} parent=51 // pred_region
          %s717 = smul.u32 2, %s22
          %719 = vsyncadd %s710, 0
          %s720 = scalar_lea.hbm %s8, %s717
          %s721 = sshll.u32 %s713, 4
          %s722 = int_to_ptr.vmem [resolvable:$true] %s721
          %s723 = sshll.u32 %s720, 4
          %s724 = int_to_ptr.hbm [resolvable:$true] %s723
          %729 = dma.vmem_to_hbm [thread:$0]  %s722, 32, %s724, %s710, 16, 16, 1
        $region63: #{tpu_custom_call.1} parent=51 // pred_fallthru
          _
      $region52: #{tpu_custom_call.1} parent=5 // pred_fallthru
        _
      %p730 = scmp.le.s32.totalorder 2, %s17
      // Predicated region
      $region64: #{tpu_custom_call.1} parent=5 // pred_check
        %p731 = pneg %p730
      $region65: #{tpu_custom_call.1} parent=5 // pred_check_branch
        %733 = sbr.rel (%p731) target = $region67
      $region66: #{tpu_custom_call.1} parent=5 // pred_region
        %s734 = ssub.s32 %s17, 2
        // Predicated region
        $region68: #{tpu_custom_call.1} parent=66 // pred_check
          %p735 = pneg %p219
        $region69: #{tpu_custom_call.1} parent=66 // pred_check_branch
          %737 = sbr.rel (%p735) target = $region71
        $region70: #{tpu_custom_call.1} parent=66 // pred_region
          %s738 = sand.u32 %s204, 1
          %s739 = scalar_lea.sflag [#allocation3], %s738
          %s740 = sand.u32 %s204, 1
          %s741 = smul.addr %s740, 2
          %s742 = scalar_lea.vmem [#allocation2], %s741
          %744 = dma.done %s739, 32
        $region71: #{tpu_custom_call.1} parent=66 // pred_fallthru
          _
      $region67: #{tpu_custom_call.1} parent=5 // pred_fallthru
        _
    $region6: #{tpu_custom_call.1} parent=1 // loop_footer
      %s21 = sadd.s32 1, %s17
    $region7: #{tpu_custom_call.1} parent=1 // loop_footer_branch
      %16 = sbr.rel target = $region3
    $region8: #{tpu_custom_call.1} parent=1 // loop_exit
      _
    %745 = vsyncpa [#allocation3], 1
    %s746 = scalar_lea.sflag [#allocation3], 1
    %747 = vsyncpa %s746, 1

</llo_original>
